<compile_context>
chip_gen: v5e
topology: v5e:2x2
jax: 0.10.0
libtpu: 0.0.40
codegen_flags: <defaults>
</compile_context>

<pallas_src>
import functools
import math

import jax
import jax.numpy as jnp
import numpy as np
from jax import lax
from jax.experimental import pallas as pl
from jax.experimental.pallas import tpu as pltpu


# --------------------------------------------------------------------------
# Tile pickers / VMEM budgeting helpers
# --------------------------------------------------------------------------
def _pick_sub_tile(n, pref):
    """Second-minor tile: divisor of n, multiple of 8 (or full dim)."""
    t = pref
    while t >= 8:
        if n % t == 0 and (t % 8 == 0 or t == n):
            return t
        t //= 2
    return n


def _pick_lane_tile(n, pref):
    """Lane (last-dim) tile: divisor of n, multiple of 128, else full dim."""
    t = pref
    while t >= 128:
        if n % t == 0:
            return t
        t //= 2
    return n


def _pick_lane_tile_rope(n, d, pref):
    """Lane tile that also aligns to head boundaries (multiple of head_dim)."""
    t = pref
    while t >= max(d, 8):
        if n % t == 0 and t % d == 0 and (t % 128 == 0 or t == n):
            return t
        t //= 2
    return n


def _padded_bytes(shape2d, dtype):
    r, c = shape2d
    r = -(-r // 8) * 8
    c = -(-c // 128) * 128
    return int(r) * int(c) * np.dtype(dtype).itemsize


def _vmem_limit(byte_count):
    # 32 MiB is safe on every generation (v7x physical VMEM is 64 MiB); only
    # raise it when the chosen tiles actually need more (e.g. large v6e tiles).
    return max(32 * 1024 * 1024, int(1.25 * byte_count))


# --------------------------------------------------------------------------
# Tiled projection kernels: y = x @ w_t  (w_t pre-transposed to (K, N))
# --------------------------------------------------------------------------
def _linear_kernel(x_ref, w_ref, o_ref, acc_ref):
    @pl.when(pl.program_id(2) == 0)
    def _():
        acc_ref[...] = jnp.zeros_like(acc_ref)

    acc_ref[...] += jnp.dot(x_ref[...], w_ref[...],
                            preferred_element_type=jnp.float32)

    @pl.when(pl.program_id(2) == pl.num_programs(2) - 1)
    def _():
        o_ref[...] = acc_ref[...].astype(o_ref.dtype)


def _linear_rope_kernel(x_ref, w_ref, cc_ref, ss_ref, o_ref, acc_ref, *, D):
    """GEMM with per-head half-split RoPE fused into the epilogue."""
    @pl.when(pl.program_id(2) == 0)
    def _():
        acc_ref[...] = jnp.zeros_like(acc_ref)

    acc_ref[...] += jnp.dot(x_ref[...], w_ref[...],
                            preferred_element_type=jnp.float32)

    @pl.when(pl.program_id(2) == pl.num_programs(2) - 1)
    def _():
        cc = cc_ref[...]                         # (tm, D) f32, scale pre-folded
        ss = ss_ref[...]
        half = D // 2
        heads_in_tile = acc_ref.shape[1] // D
        for t in range(heads_in_tile):           # per-head slices: (tm, D) live
            y = acc_ref[:, t * D:(t + 1) * D]
            y_sw = jnp.concatenate([y[:, half:], y[:, :half]], axis=-1)
            o_ref[:, t * D:(t + 1) * D] = (y * cc + y_sw * ss).astype(o_ref.dtype)


def linear_pallas(x2d, w_t, tm=512, tn=512, tk=512):
    """x2d: (M, K); w_t: (K, N) -> (M, N)."""
    M, K = x2d.shape
    K2, N = w_t.shape
    assert K == K2
    tm = _pick_sub_tile(M, tm)
    tn = _pick_lane_tile(N, tn)
    tk = _pick_lane_tile(K, tk)
    grid = (M // tm, N // tn, K // tk)
    vmem = _vmem_limit(
        2 * _padded_bytes((tm, tk), x2d.dtype)
        + 2 * _padded_bytes((tk, tn), w_t.dtype)
        + 2 * _padded_bytes((tm, tn), x2d.dtype)
        + _padded_bytes((tm, tn), jnp.float32))
    return pl.pallas_call(
        _linear_kernel,
        out_shape=jax.ShapeDtypeStruct((M, N), x2d.dtype),
        grid_spec=pltpu.PrefetchScalarGridSpec(
            num_scalar_prefetch=0,
            grid=grid,
            in_specs=[
                pl.BlockSpec((tm, tk), lambda i, j, k: (i, k)),
                pl.BlockSpec((tk, tn), lambda i, j, k: (k, j)),
            ],
            out_specs=pl.BlockSpec((tm, tn), lambda i, j, k: (i, j)),
            scratch_shapes=[pltpu.VMEM((tm, tn), jnp.float32)],
        ),
        compiler_params=pltpu.CompilerParams(
            dimension_semantics=("parallel", "parallel", "arbitrary"),
            vmem_limit_bytes=vmem,
        ),
    )(x2d, w_t)


def linear_rope_pallas(x2d, w_t, cc_rows, ss_rows, head_dim,
                       tm=512, tn=512, tk=512):
    """x2d: (M, K); w_t: (K, H*D); cc/ss: (M, D) f32 -> rotated (M, H*D)."""
    M, K = x2d.shape
    K2, N = w_t.shape
    D = head_dim
    assert K == K2 and N % D == 0
    tm = _pick_sub_tile(M, tm)
    tn = _pick_lane_tile_rope(N, D, tn)
    tk = _pick_lane_tile(K, tk)
    grid = (M // tm, N // tn, K // tk)
    vmem = _vmem_limit(
        2 * _padded_bytes((tm, tk), x2d.dtype)
        + 2 * _padded_bytes((tk, tn), w_t.dtype)
        + 2 * _padded_bytes((tm, tn), x2d.dtype)
        + _padded_bytes((tm, tn), jnp.float32)
        + 4 * _padded_bytes((tm, D), jnp.float32))
    kernel = functools.partial(_linear_rope_kernel, D=D)
    return pl.pallas_call(
        kernel,
        out_shape=jax.ShapeDtypeStruct((M, N), x2d.dtype),
        grid_spec=pltpu.PrefetchScalarGridSpec(
            num_scalar_prefetch=0,
            grid=grid,
            in_specs=[
                pl.BlockSpec((tm, tk), lambda i, j, k: (i, k)),
                pl.BlockSpec((tk, tn), lambda i, j, k: (k, j)),
                pl.BlockSpec((tm, D), lambda i, j, k: (i, 0)),
                pl.BlockSpec((tm, D), lambda i, j, k: (i, 0)),
            ],
            out_specs=pl.BlockSpec((tm, tn), lambda i, j, k: (i, j)),
            scratch_shapes=[pltpu.VMEM((tm, tn), jnp.float32)],
        ),
        compiler_params=pltpu.CompilerParams(
            dimension_semantics=("parallel", "parallel", "arbitrary"),
            vmem_limit_bytes=vmem,
        ),
    )(x2d, w_t, cc_rows, ss_rows)


# --------------------------------------------------------------------------
# Flash attention kernel: compacted causal grid, GQA-batched matmuls
# --------------------------------------------------------------------------
def _flash_kernel(qi_ref, ki_ref, q_ref, k_ref, v_ref, o_ref,
                  stats_ref, acc_ref, qstk_ref, *, H, Hkv, D, tq, tk):
    hpg = H // Hkv
    t = pl.program_id(1)
    qi = qi_ref[t]
    ki = ki_ref[t]

    # ---- init: first kv tile of this q tile ------------------------------
    @pl.when(ki == 0)
    def _init():
        for g in range(Hkv):
            stats_ref[g, :, 0:1] = jnp.full((hpg * tq, 1), -1e30, jnp.float32)
            stats_ref[g, :, 1:2] = jnp.zeros((hpg * tq, 1), jnp.float32)
        acc_ref[...] = jnp.zeros_like(acc_ref)
        # Stack the hpg query heads of each GQA group into one (hpg*tq, D)
        # slab, once per q tile; per-head Ref slices keep only (tq, D) live.
        for g in range(Hkv):
            for hl in range(hpg):
                h = g * hpg + hl
                qstk_ref[g, hl * tq:(hl + 1) * tq, :] = \
                    q_ref[0, :, h * D:(h + 1) * D]

    # ---- online-softmax accumulation --------------------------------------
    def _accumulate(masked):
        if masked:
            row = lax.broadcasted_iota(jnp.int32, (tq, tk), 0)
            col = lax.broadcasted_iota(jnp.int32, (tq, tk), 1)
            bias1 = jnp.where(row >= col, 0.0, -1e30).astype(jnp.float32)
            bias = jnp.tile(bias1, (hpg, 1)) if hpg > 1 else bias1
        for g in range(Hkv):
            qg = qstk_ref[g]                         # (hpg*tq, D)
            kg = k_ref[0, :, g * D:(g + 1) * D]      # (tk, D)
            vg = v_ref[0, :, g * D:(g + 1) * D]      # (tk, D)
            s = lax.dot_general(qg, kg, (((1,), (1,)), ((), ())),
                                preferred_element_type=jnp.float32)
            if masked:
                s = s + bias
            m_prev = stats_ref[g, :, 0:1]
            l_prev = stats_ref[g, :, 1:2]
            m_new = jnp.maximum(m_prev, jnp.max(s, axis=-1, keepdims=True))
            alpha = jnp.exp(m_prev - m_new)
            p = jnp.exp(s - m_new)
            stats_ref[g, :, 0:1] = m_new
            stats_ref[g, :, 1:2] = alpha * l_prev + jnp.sum(p, axis=-1,
                                                            keepdims=True)
            acc_ref[g] = alpha * acc_ref[g] + lax.dot_general(
                p.astype(vg.dtype), vg, (((1,), (0,)), ((), ())),
                preferred_element_type=jnp.float32)

    @pl.when(ki < qi)        # below-diagonal tiles: no mask work at all
    def _():
        _accumulate(masked=False)

    @pl.when(ki == qi)       # diagonal tile: causal mask applied
    def _():
        _accumulate(masked=True)

    # ---- finalize: last kv tile of this q tile -----------------------------
    @pl.when(ki == qi)
    def _fin():
        approx = np.dtype(o_ref.dtype) != np.dtype(np.float32)
        for g in range(Hkv):
            inv = pl.reciprocal(stats_ref[g, :, 1:2], approx=approx)
            for hl in range(hpg):
                h = g * hpg + hl
                # TODO(synk): on v5e with D=64, pair heads so stores stay
                #             full-128-lane unmasked vst.
                o_ref[0, :, h * D:(h + 1) * D] = (
                    acc_ref[g, hl * tq:(hl + 1) * tq, :]
                    * inv[hl * tq:(hl + 1) * tq, :]).astype(o_ref.dtype)


def flash_attention_pallas(q, k, v, n_heads, n_kv_heads, head_dim, block=None):
    """q: (B,S,H*D); k,v: (B,S,Hkv*D) (already RoPE'd / scaled) -> (B,S,H*D)."""
    B, S, _ = q.shape
    H, Hkv, D = n_heads, n_kv_heads, head_dim
    hpg = H // Hkv
    # v6e (128 MiB VMEM, 256-wide MXU) prefers tq=256 with bf16; keep 128 as a
    # v7x-safe (64 MiB VMEM) default.
    tq = block if block is not None else _pick_sub_tile(S, 128)
    tk = tq
    assert S % tq == 0
    n_q = S // tq

    # Compacted lower-triangular (qi, ki) schedule: no dead above-diagonal
    # steps; for each qi, ki runs 0..qi so init (ki==0) and finalize (ki==qi)
    # bracket a contiguous run sharing the same resident output block.
    pairs = [(qi, ki) for qi in range(n_q) for ki in range(qi + 1)]
    qi_arr = jnp.asarray([p[0] for p in pairs], dtype=jnp.int32)
    ki_arr = jnp.asarray([p[1] for p in pairs], dtype=jnp.int32)
    n_steps = len(pairs)

    kernel = functools.partial(_flash_kernel, H=H, Hkv=Hkv, D=D, tq=tq, tk=tk)

    vmem = _vmem_limit(
        4 * _padded_bytes((tq, H * D), q.dtype)              # q + out (x2 buf)
        + 4 * _padded_bytes((tk, Hkv * D), k.dtype)          # k + v (x2 buf)
        + Hkv * _padded_bytes((hpg * tq, D), jnp.float32)    # accumulator
        + Hkv * _padded_bytes((hpg * tq, 128), jnp.float32)  # packed m/l stats
        + Hkv * _padded_bytes((hpg * tq, D), q.dtype))       # stacked q

    return pl.pallas_call(
        kernel,
        out_shape=jax.ShapeDtypeStruct((B, S, H * D), q.dtype),
        grid_spec=pltpu.PrefetchScalarGridSpec(
            num_scalar_prefetch=2,
            grid=(B, n_steps),
            in_specs=[
                pl.BlockSpec((1, tq, H * D),
                             lambda b, t, qi, ki: (b, qi[t], 0)),
                pl.BlockSpec((1, tk, Hkv * D),
                             lambda b, t, qi, ki: (b, ki[t], 0)),
                pl.BlockSpec((1, tk, Hkv * D),
                             lambda b, t, qi, ki: (b, ki[t], 0)),
            ],
            out_specs=pl.BlockSpec((1, tq, H * D),
                                   lambda b, t, qi, ki: (b, qi[t], 0)),
            scratch_shapes=[
                pltpu.VMEM((Hkv, hpg * tq, 128), jnp.float32),  # m(lane0)/l(lane1)
                pltpu.VMEM((Hkv, hpg * tq, D), jnp.float32),    # output accumulator
                pltpu.VMEM((Hkv, hpg * tq, D), q.dtype),        # GQA-stacked q
            ],
        ),
        compiler_params=pltpu.CompilerParams(
            dimension_semantics=("parallel", "arbitrary"),
            vmem_limit_bytes=vmem,
        ),
    )(qi_arr, ki_arr, q, k, v)


# --------------------------------------------------------------------------
# Parameter init / prep, rope table
# --------------------------------------------------------------------------
def init_attention_params(key, dim, head_dim, n_heads, n_kv_heads):
    std = dim ** -0.5
    k1, k2, k3, k4 = jax.random.split(key, 4)

    def trunc(k, shape):
        return std * jax.random.truncated_normal(k, -3.0, 3.0, shape, jnp.float32)

    return dict(
        wq=trunc(k1, (n_heads * head_dim, dim)),
        wk=trunc(k2, (n_kv_heads * head_dim, dim)),
        wv=trunc(k3, (n_kv_heads * head_dim, dim)),
        wo=trunc(k4, (dim, n_heads * head_dim)),
    )


def prepare_params(params, n_heads, n_kv_heads, head_dim):
    """One-time prep: permute wq/wk output features per head from interleaved
    (even,odd) to half-split order (so the fused RoPE needs no lane
    deinterleave; q.k^T is invariant), and pre-transpose all weights to (K, N)."""
    D = head_dim
    perm = jnp.concatenate([jnp.arange(0, D, 2), jnp.arange(1, D, 2)])

    def perm_heads(w, H):  # w in torch layout (H*D, in_features)
        return w.reshape(H, D, -1)[:, perm, :].reshape(H * D, -1)

    return dict(
        wq_t=perm_heads(params["wq"], n_heads).T,
        wk_t=perm_heads(params["wk"], n_kv_heads).T,
        wv_t=params["wv"].T,
        wo_t=params["wo"].T,
    )


def precompute_freqs_cis(dim, end, theta):
    freqs = 1.0 / (theta ** (jnp.arange(0, dim, 2)[: dim // 2].astype(jnp.float32) / dim))
    t = jnp.arange(end, dtype=jnp.float32)
    freqs = jnp.outer(t, freqs)
    cos, sin = jnp.cos(freqs), jnp.sin(freqs)
    return jnp.stack([cos, -sin, sin, cos], axis=-1).reshape(end, dim // 2, 2, 2)


# --------------------------------------------------------------------------
# Full forward: Attention.forward(x, freq_cis, mask='causal', attn_impl='sdpa')
# --------------------------------------------------------------------------
def attention_forward(params_t, x, freq_cis, n_heads, n_kv_heads, head_dim,
                      attn_block=None):
    B, S, dim = x.shape
    H, Hkv, D = n_heads, n_kv_heads, head_dim
    assert D % 2 == 0 and H % Hkv == 0

    # RoPE tables in the half-split basis, broadcast over batch rows.
    fc = freq_cis[:S]
    cos = fc[:, :, 0, 0].astype(jnp.float32)                 # (S, D/2)
    sin = fc[:, :, 1, 0].astype(jnp.float32)
    cc = jnp.concatenate([cos, cos], axis=-1)                # (S, D)
    ss = jnp.concatenate([-sin, sin], axis=-1)
    cc_rows = jnp.tile(cc, (B, 1))                           # (B*S, D)
    ss_rows = jnp.tile(ss, (B, 1))
    scale = 1.0 / math.sqrt(D)

    xflat = x.reshape(B * S, dim)
    # TODO(synk): fuse wq/wk/wv into one GEMM (single read of x) once the
    #             epilogue handles mixed rope / no-rope column regions.
    q = linear_rope_pallas(xflat, params_t["wq_t"], cc_rows * scale,
                           ss_rows * scale, D).reshape(B, S, H * D)
    k = linear_rope_pallas(xflat, params_t["wk_t"], cc_rows, ss_rows,
                           D).reshape(B, S, Hkv * D)
    v = linear_pallas(xflat, params_t["wv_t"]).reshape(B, S, Hkv * D)

    o = flash_attention_pallas(q, k, v, H, Hkv, D, block=attn_block)
    return linear_pallas(o.reshape(B * S, H * D),
                         params_t["wo_t"]).reshape(B, S, dim)


# --------------------------------------------------------------------------
# Pure-JAX reference (mirrors the torch code) for a correctness check
# --------------------------------------------------------------------------
def attention_reference(params, x, freq_cis, n_heads, n_kv_heads, head_dim):
    B, S, dim = x.shape
    H, Hkv, D = n_heads, n_kv_heads, head_dim
    hpg = H // Hkv
    xq = jnp.einsum("bsd,nd->bsn", x, params["wq"]).reshape(B, S, H, D)
    xk = jnp.einsum("bsd,nd->bsn", x, params["wk"]).reshape(B, S, Hkv, D)
    xv = jnp.einsum("bsd,nd->bsn", x, params["wv"]).reshape(B, S, Hkv, D)
    fc = freq_cis[:S]

    def rope(t):
        tp = t.reshape(*t.shape[:-1], -1, 1, 2)        # (B,S,h,D/2,1,2)
        f = fc[None, :, None, :, :, :]                 # (1,S,1,D/2,2,2)
        return (tp * f).sum(-1).reshape(t.shape)

    xq, xk = rope(xq), rope(xk)
    xk = jnp.repeat(xk, hpg, axis=2)
    xv = jnp.repeat(xv, hpg, axis=2)
    q, k, v = (jnp.transpose(a, (0, 2, 1, 3)) for a in (xq, xk, xv))
    s = jnp.einsum("bhqd,bhkd->bhqk", q, k) / math.sqrt(D)
    mask = jnp.tril(jnp.ones((S, S), dtype=bool))
    s = jnp.where(mask, s, -jnp.inf)
    p = jax.nn.softmax(s, axis=-1)
    o = jnp.einsum("bhqk,bhkd->bhqd", p, v)
    o = jnp.transpose(o, (0, 2, 1, 3)).reshape(B, S, H * D)
    return jnp.einsum("bsn,dn->bsd", o, params["wo"])


if __name__ == "__main__":
    dim, head_dim, n_heads, n_kv_heads = 32, 16, 4, 2
    rope_theta = 10000.0

    key = jax.random.PRNGKey(0)
    kp, kx1, kx2 = jax.random.split(key, 3)
    params = init_attention_params(kp, dim, head_dim, n_heads, n_kv_heads)
    params_t = prepare_params(params, n_heads, n_kv_heads, head_dim)
    freq_cis = precompute_freqs_cis(head_dim, 256, rope_theta)  # (max_seq, D/2, 2, 2)

    # Small shape: a single attention tile (init + masked diag + finalize in one step).
    B, S = 2, 8
    x = jax.random.normal(kx1, (B, S, dim), jnp.float32)
    out = attention_forward(params_t, x, freq_cis, n_heads, n_kv_heads, head_dim)
    out = jax.block_until_ready(out)
    ref = attention_reference(params, x, freq_cis, n_heads, n_kv_heads, head_dim)
    np.testing.assert_allclose(np.asarray(out), np.asarray(ref), rtol=2e-2, atol=2e-2)

    # Multi-tile: exercises the compacted triangular grid, running softmax,
    # the unmasked below-diagonal path and the masked diagonal path.
    B2, S2 = 2, 32
    x2 = jax.random.normal(kx2, (B2, S2, dim), jnp.float32)
    out2 = attention_forward(params_t, x2, freq_cis, n_heads, n_kv_heads,
                             head_dim, attn_block=8)
    out2 = jax.block_until_ready(out2)
    ref2 = attention_reference(params, x2, freq_cis, n_heads, n_kv_heads, head_dim)
    np.testing.assert_allclose(np.asarray(out2), np.asarray(ref2), rtol=2e-2, atol=2e-2)

    # bf16 activation/weight smoke run (f32 softmax stats / accumulators inside).
    params_bf16 = {n: w.astype(jnp.bfloat16) for n, w in params_t.items()}
    out_bf16 = attention_forward(params_bf16, x2.astype(jnp.bfloat16), freq_cis,
                                 n_heads, n_kv_heads, head_dim, attn_block=8)
    out_bf16 = jax.block_until_ready(out_bf16)
    assert bool(jnp.all(jnp.isfinite(out_bf16.astype(jnp.float32)))), \
        "bf16 path produced non-finite values"

    print("KERNEL_OK")
</pallas_src>

<mosaic_0001>
module attributes {stable_mosaic.version = 11 : i64} {
  func.func @_linear_rope_kernel(%arg0: i32, %arg1: i32, %arg2: i32, %arg3: memref<16x32xf32, #tpu.memory_space<vmem>>, %arg4: memref<32x64xf32, #tpu.memory_space<vmem>>, %arg5: memref<16x16xf32, #tpu.memory_space<vmem>>, %arg6: memref<16x16xf32, #tpu.memory_space<vmem>>, %arg7: memref<16x64xf32, #tpu.memory_space<vmem>>, %arg8: memref<16x64xf32, #tpu.memory_space<vmem>>) attributes {dimension_semantics = [#tpu.dimension_semantics<parallel>, #tpu.dimension_semantics<parallel>, #tpu.dimension_semantics<arbitrary>], iteration_bounds = array<i64: 1, 1, 1>, scalar_prefetch = 0 : i64, scratch_operands = 1 : i64, tpu.core_type = #tpu.core_type<tc>, window_params = [{transform_indices = @transform_0, window_bounds = array<i64: 16, 32>}, {transform_indices = @transform_1, window_bounds = array<i64: 32, 64>}, {transform_indices = @transform_2, window_bounds = array<i64: 16, 16>}, {transform_indices = @transform_3, window_bounds = array<i64: 16, 16>}, {transform_indices = @transform_4, window_bounds = array<i64: 16, 64>}]} {
    %c0_i32 = arith.constant 0 : i32
    %0 = arith.cmpi eq, %arg2, %c0_i32 : i32
    %1 = arith.extui %0 : i1 to i32
    %c0_i32_0 = arith.constant 0 : i32
    %2 = arith.cmpi ne, %1, %c0_i32_0 : i32
    scf.if %2 {
      %cst_10 = arith.constant 0.000000e+00 : f32
      %12 = vector.broadcast %cst_10 : f32 to vector<16x64xf32>
      %c0_11 = arith.constant 0 : index
      %c0_12 = arith.constant 0 : index
      %13 = vector.load %arg8[%c0_11, %c0_12] : memref<16x64xf32, #tpu.memory_space<vmem>>, vector<16x64xf32>
      tpu.vector_store %arg8[%c0_11, %c0_12], %12 {strides = array<i32>} : memref<16x64xf32, #tpu.memory_space<vmem>>, vector<16x64xf32>,
    } else {
    }
    %c0 = arith.constant 0 : index
    %c0_1 = arith.constant 0 : index
    %3 = vector.load %arg8[%c0, %c0_1] : memref<16x64xf32, #tpu.memory_space<vmem>>, vector<16x64xf32>
    %c0_2 = arith.constant 0 : index
    %c0_3 = arith.constant 0 : index
    %4 = vector.load %arg3[%c0_2, %c0_3] : memref<16x32xf32, #tpu.memory_space<vmem>>, vector<16x32xf32>
    %c0_4 = arith.constant 0 : index
    %c0_5 = arith.constant 0 : index
    %5 = vector.load %arg4[%c0_4, %c0_5] : memref<32x64xf32, #tpu.memory_space<vmem>>, vector<32x64xf32>
    %cst = arith.constant dense<0.000000e+00> : vector<16x64xf32>
    %6 = tpu.matmul %4, %5, %cst {dimension_numbers = #tpu.dot_dimension_numbers<[1], [0], [0], [1], [0, 0, 1, 1], [], []>} : vector<16x32xf32>, vector<32x64xf32>, vector<16x64xf32> -> vector<16x64xf32>
    %7 = arith.addf %3, %6 : vector<16x64xf32>
    %c0_6 = arith.constant 0 : index
    %c0_7 = arith.constant 0 : index
    %8 = vector.load %arg8[%c0_6, %c0_7] : memref<16x64xf32, #tpu.memory_space<vmem>>, vector<16x64xf32>
    tpu.vector_store %arg8[%c0_6, %c0_7], %7 {strides = array<i32>} : memref<16x64xf32, #tpu.memory_space<vmem>>, vector<16x64xf32>,
    %c0_i32_8 = arith.constant 0 : i32
    %9 = arith.cmpi eq, %arg2, %c0_i32_8 : i32
    %10 = arith.extui %9 : i1 to i32
    %c0_i32_9 = arith.constant 0 : i32
    %11 = arith.cmpi ne, %10, %c0_i32_9 : i32
    scf.if %11 {
      %c0_10 = arith.constant 0 : index
      %c0_11 = arith.constant 0 : index
      %12 = vector.load %arg5[%c0_10, %c0_11] : memref<16x16xf32, #tpu.memory_space<vmem>>, vector<16x16xf32>
      %c0_12 = arith.constant 0 : index
      %c0_13 = arith.constant 0 : index
      %13 = vector.load %arg6[%c0_12, %c0_13] : memref<16x16xf32, #tpu.memory_space<vmem>>, vector<16x16xf32>
      %c0_14 = arith.constant 0 : index
      %c0_15 = arith.constant 0 : index
      %14 = vector.load %arg8[%c0_14, %c0_15] : memref<16x64xf32, #tpu.memory_space<vmem>>, vector<16x16xf32>
      %15 = vector.extract_strided_slice %14 {offsets = [0, 8], sizes = [16, 8], strides = [1, 1]} : vector<16x16xf32> to vector<16x8xf32>
      %16 = vector.extract_strided_slice %14 {offsets = [0, 0], sizes = [16, 8], strides = [1, 1]} : vector<16x16xf32> to vector<16x8xf32>
      %17 = tpu.concatenate %15, %16 in 1 : vector<16x8xf32>, vector<16x8xf32> -> vector<16x16xf32>
      %18 = arith.mulf %14, %12 : vector<16x16xf32>
      %19 = arith.mulf %17, %13 : vector<16x16xf32>
      %20 = arith.addf %18, %19 : vector<16x16xf32>
      %c0_16 = arith.constant 0 : index
      %c0_17 = arith.constant 0 : index
      %21 = vector.load %arg7[%c0_16, %c0_17] : memref<16x64xf32, #tpu.memory_space<vmem>>, vector<16x16xf32>
      tpu.vector_store %arg7[%c0_16, %c0_17], %20 {strides = array<i32>} : memref<16x64xf32, #tpu.memory_space<vmem>>, vector<16x16xf32>,
      %c0_18 = arith.constant 0 : index
      %c16 = arith.constant 16 : index
      %22 = vector.load %arg8[%c0_18, %c16] : memref<16x64xf32, #tpu.memory_space<vmem>>, vector<16x16xf32>
      %23 = vector.extract_strided_slice %22 {offsets = [0, 8], sizes = [16, 8], strides = [1, 1]} : vector<16x16xf32> to vector<16x8xf32>
      %24 = vector.extract_strided_slice %22 {offsets = [0, 0], sizes = [16, 8], strides = [1, 1]} : vector<16x16xf32> to vector<16x8xf32>
      %25 = tpu.concatenate %23, %24 in 1 : vector<16x8xf32>, vector<16x8xf32> -> vector<16x16xf32>
      %26 = arith.mulf %22, %12 : vector<16x16xf32>
      %27 = arith.mulf %25, %13 : vector<16x16xf32>
      %28 = arith.addf %26, %27 : vector<16x16xf32>
      %c0_19 = arith.constant 0 : index
      %c16_20 = arith.constant 16 : index
      %29 = vector.load %arg7[%c0_19, %c16_20] : memref<16x64xf32, #tpu.memory_space<vmem>>, vector<16x16xf32>
      tpu.vector_store %arg7[%c0_19, %c16_20], %28 {strides = array<i32>} : memref<16x64xf32, #tpu.memory_space<vmem>>, vector<16x16xf32>,
      %c0_21 = arith.constant 0 : index
      %c32 = arith.constant 32 : index
      %30 = vector.load %arg8[%c0_21, %c32] : memref<16x64xf32, #tpu.memory_space<vmem>>, vector<16x16xf32>
      %31 = vector.extract_strided_slice %30 {offsets = [0, 8], sizes = [16, 8], strides = [1, 1]} : vector<16x16xf32> to vector<16x8xf32>
      %32 = vector.extract_strided_slice %30 {offsets = [0, 0], sizes = [16, 8], strides = [1, 1]} : vector<16x16xf32> to vector<16x8xf32>
      %33 = tpu.concatenate %31, %32 in 1 : vector<16x8xf32>, vector<16x8xf32> -> vector<16x16xf32>
      %34 = arith.mulf %30, %12 : vector<16x16xf32>
      %35 = arith.mulf %33, %13 : vector<16x16xf32>
      %36 = arith.addf %34, %35 : vector<16x16xf32>
      %c0_22 = arith.constant 0 : index
      %c32_23 = arith.constant 32 : index
      %37 = vector.load %arg7[%c0_22, %c32_23] : memref<16x64xf32, #tpu.memory_space<vmem>>, vector<16x16xf32>
      tpu.vector_store %arg7[%c0_22, %c32_23], %36 {strides = array<i32>} : memref<16x64xf32, #tpu.memory_space<vmem>>, vector<16x16xf32>,
      %c0_24 = arith.constant 0 : index
      %c48 = arith.constant 48 : index
      %38 = vector.load %arg8[%c0_24, %c48] : memref<16x64xf32, #tpu.memory_space<vmem>>, vector<16x16xf32>
      %39 = vector.extract_strided_slice %38 {offsets = [0, 8], sizes = [16, 8], strides = [1, 1]} : vector<16x16xf32> to vector<16x8xf32>
      %40 = vector.extract_strided_slice %38 {offsets = [0, 0], sizes = [16, 8], strides = [1, 1]} : vector<16x16xf32> to vector<16x8xf32>
      %41 = tpu.concatenate %39, %40 in 1 : vector<16x8xf32>, vector<16x8xf32> -> vector<16x16xf32>
      %42 = arith.mulf %38, %12 : vector<16x16xf32>
      %43 = arith.mulf %41, %13 : vector<16x16xf32>
      %44 = arith.addf %42, %43 : vector<16x16xf32>
      %c0_25 = arith.constant 0 : index
      %c48_26 = arith.constant 48 : index
      %45 = vector.load %arg7[%c0_25, %c48_26] : memref<16x64xf32, #tpu.memory_space<vmem>>, vector<16x16xf32>
      tpu.vector_store %arg7[%c0_25, %c48_26], %44 {strides = array<i32>} : memref<16x64xf32, #tpu.memory_space<vmem>>, vector<16x16xf32>,
    } else {
    }
    return
  }
  func.func @transform_0(%arg0: i32, %arg1: i32, %arg2: i32) -> (i32, i32) {
    %c0_i32 = arith.constant 0 : i32
    return %arg0, %arg2 : i32, i32
  }
  func.func @transform_1(%arg0: i32, %arg1: i32, %arg2: i32) -> (i32, i32) {
    %c0_i32 = arith.constant 0 : i32
    return %arg2, %arg1 : i32, i32
  }
  func.func @transform_2(%arg0: i32, %arg1: i32, %arg2: i32) -> (i32, i32) {
    %c0_i32 = arith.constant 0 : i32
    %c0_i32_0 = arith.constant 0 : i32
    return %arg0, %c0_i32 : i32, i32
  }
  func.func @transform_3(%arg0: i32, %arg1: i32, %arg2: i32) -> (i32, i32) {
    %c0_i32 = arith.constant 0 : i32
    %c0_i32_0 = arith.constant 0 : i32
    return %arg0, %c0_i32 : i32, i32
  }
  func.func @transform_4(%arg0: i32, %arg1: i32, %arg2: i32) -> (i32, i32) {
    %c0_i32 = arith.constant 0 : i32
    return %arg0, %arg1 : i32, i32
  }
}

</mosaic_0001>

<llo_original>
// kernel: tpu_custom_call.1
$region0: #{tpu_custom_call.1}
  #allocation0 [shape = 'u32[]', space=smem, size = 0x4, offset = 0x4, fixed_abs, tag = 'smem constant byte address 0x4 - core index']
  #allocation1 [shape = 'u32[72,128]{1,0:T(1,128)}', space=vmem, size = 0x9000, scoped, tag = 'internal scratch']
  #allocation2 [shape = 'f32[16,64]{1,0:T(8,128)}', space=vmem, size = 0x2000, scoped, tag = 'scratch operand']
  %s0 = inlined_call_operand.hbm [shape: f32[16,32], index: 0, kind: input, shape index: {}]
  %s1 = inlined_call_operand.hbm [shape: f32[32,64], index: 1, kind: input, shape index: {}]
  %s2 = inlined_call_operand.hbm [shape: f32[16,16], index: 2, kind: input, shape index: {}]
  %s3 = inlined_call_operand.hbm [shape: f32[16,16], index: 3, kind: input, shape index: {}]
  %s4 = inlined_call_operand.hbm [shape: f32[16,64], index: 4, kind: output, shape index: {}]
  %s5 = sld [smem:[#allocation0]]
  $region50: #{tpu_custom_call.1} parent=0
    _
  %s7 = ssub.s32 1, %s5
  %s8 = scalar_select 0, %s7, %s5
  $region1: #{tpu_custom_call.1} parent=0
    #allocation3 [shape = 'u8[8192]{0}', space=vmem, size = 0x2000, scoped, tag = 'input window, operand 0, single buffered']
    #allocation4 [shape = 's32[1]{0}', space=sflag, size = 0x4, scoped, tag = 'scoped memory for tpu_custom_call.1']
    #allocation5 [shape = 's32[1]{0}', space=sflag, size = 0x4, scoped, tag = 'scoped memory for tpu_custom_call.1']
    #allocation6 [shape = 'u8[16384]{0}', space=vmem, size = 0x4000, scoped, tag = 'input window, operand 1, single buffered']
    #allocation7 [shape = 's32[1]{0}', space=sflag, size = 0x4, scoped, tag = 'scoped memory for tpu_custom_call.1']
    #allocation8 [shape = 'u8[8192]{0}', space=vmem, size = 0x2000, scoped, tag = 'input window, operand 2, single buffered']
    #allocation9 [shape = 'u8[8192]{0}', space=vmem, size = 0x2000, scoped, tag = 'input window, operand 3, single buffered']
    #allocation10 [shape = 's32[1]{0}', space=sflag, size = 0x4, scoped, tag = 'scoped memory for tpu_custom_call.1']
    #allocation11 [shape = 'u8[8192]{0}', space=vmem, size = 0x2000, scoped, tag = 'output window, operand 0, single buffered']
    %9 = vsyncpa [#allocation4], 0
    %10 = vsyncpa [#allocation7], 0
    %11 = vsyncpa [#allocation10], 0
    %12 = vsyncpa [#allocation5], 0
    // Predicated region
    $region2: #{tpu_custom_call.1} parent=1 // pred_check
      _
    $region3: #{tpu_custom_call.1} parent=1 // pred_check_branch
      %14 = sbr.rel (0) target = $region5
    $region4: #{tpu_custom_call.1} parent=1 // pred_region
      %16 = vsyncadd [#allocation4], 0
      %s17 = sshll.u32 %s0, 4
      %s18 = int_to_ptr.hbm [resolvable:$true] %s17
      %s19 = sshll.u32 [#allocation3], 4
      %s20 = int_to_ptr.vmem [resolvable:$true] %s19
      %25 = dma.hbm_to_vmem [thread:$0]  %s18, 256, %s20, [#allocation4], 128, 128, 8
    $region5: #{tpu_custom_call.1} parent=1 // pred_fallthru
      _
    // Predicated region
    $region6: #{tpu_custom_call.1} parent=1 // pred_check
      _
    $region7: #{tpu_custom_call.1} parent=1 // pred_check_branch
      %27 = sbr.rel (0) target = $region9
    $region8: #{tpu_custom_call.1} parent=1 // pred_region
      %29 = vsyncadd [#allocation7], 0
      %s30 = sshll.u32 %s1, 4
      %s31 = int_to_ptr.hbm [resolvable:$true] %s30
      %s32 = sshll.u32 [#allocation6], 4
      %s33 = int_to_ptr.vmem [resolvable:$true] %s32
      %38 = dma.hbm_to_vmem [thread:$0]  %s31, 512, %s33, [#allocation7], 128, 128, 8
    $region9: #{tpu_custom_call.1} parent=1 // pred_fallthru
      _
    // Predicated region
    $region10: #{tpu_custom_call.1} parent=1 // pred_check
      _
    $region11: #{tpu_custom_call.1} parent=1 // pred_check_branch
      %40 = sbr.rel (0) target = $region13
    $region12: #{tpu_custom_call.1} parent=1 // pred_region
      %42 = vsyncadd [#allocation7], 0
      %s43 = sshll.u32 %s2, 4
      %s44 = int_to_ptr.hbm [resolvable:$true] %s43
      %s45 = sshll.u32 [#allocation8], 4
      %s46 = int_to_ptr.vmem [resolvable:$true] %s45
      %51 = dma.hbm_to_vmem [thread:$0]  %s44, 256, %s46, [#allocation7], 128, 128, 8
    $region13: #{tpu_custom_call.1} parent=1 // pred_fallthru
      _
    // Predicated region
    $region14: #{tpu_custom_call.1} parent=1 // pred_check
      _
    $region15: #{tpu_custom_call.1} parent=1 // pred_check_branch
      %53 = sbr.rel (0) target = $region17
    $region16: #{tpu_custom_call.1} parent=1 // pred_region
      %55 = vsyncadd [#allocation10], 0
      %s56 = sshll.u32 %s3, 4
      %s57 = int_to_ptr.hbm [resolvable:$true] %s56
      %s58 = sshll.u32 [#allocation9], 4
      %s59 = int_to_ptr.vmem [resolvable:$true] %s58
      %64 = dma.hbm_to_vmem [thread:$0]  %s57, 256, %s59, [#allocation10], 128, 128, 8
    $region17: #{tpu_custom_call.1} parent=1 // pred_fallthru
      _
    // Predicated region
    $region18: #{tpu_custom_call.1} parent=1 // pred_check
      _
    $region19: #{tpu_custom_call.1} parent=1 // pred_check_branch
      %66 = sbr.rel (0) target = $region21
    $region20: #{tpu_custom_call.1} parent=1 // pred_region
      %68 = dma.done [#allocation4], 256
    $region21: #{tpu_custom_call.1} parent=1 // pred_fallthru
      _
    // Predicated region
    $region22: #{tpu_custom_call.1} parent=1 // pred_check
      _
    $region23: #{tpu_custom_call.1} parent=1 // pred_check_branch
      %70 = sbr.rel (0) target = $region25
    $region24: #{tpu_custom_call.1} parent=1 // pred_region
      %72 = dma.done [#allocation7], 512
    $region25: #{tpu_custom_call.1} parent=1 // pred_fallthru
      _
    // Predicated region
    $region26: #{tpu_custom_call.1} parent=1 // pred_check
      _
    $region27: #{tpu_custom_call.1} parent=1 // pred_check_branch
      %74 = sbr.rel (0) target = $region29
    $region28: #{tpu_custom_call.1} parent=1 // pred_region
      %76 = dma.done [#allocation7], 256
    $region29: #{tpu_custom_call.1} parent=1 // pred_fallthru
      _
    // Predicated region
    $region30: #{tpu_custom_call.1} parent=1 // pred_check
      _
    $region31: #{tpu_custom_call.1} parent=1 // pred_check_branch
      %78 = sbr.rel (0) target = $region33
    $region32: #{tpu_custom_call.1} parent=1 // pred_region
      %80 = dma.done [#allocation10], 256
    $region33: #{tpu_custom_call.1} parent=1 // pred_fallthru
      _
    %p81 = scmp.eq.s32.totalorder 0, 0
    // Predicated region
    $region34: #{tpu_custom_call.1} parent=1 // pred_check
      %p82 = pneg %p81
    $region35: #{tpu_custom_call.1} parent=1 // pred_check_branch
      %84 = sbr.rel (%p82) target = $region37
    $region36: #{tpu_custom_call.1} parent=1 // pred_region
      %vm85 = vcmask 523264
      %86 = vst.msk [vmem:[#allocation2] sm:$0xff] %vm85, 0.0
      %87 = vst.msk [vmem:[#allocation2 + $0x8] sm:$0xff] %vm85, 0.0
    $region37: #{tpu_custom_call.1} parent=1 // pred_fallthru
      _
    %v88 = vld [vmem:[#allocation2] sm:$0xff]
    %v89 = vld [vmem:[#allocation2 + $0x8] sm:$0xff]
    %v90 = vld [vmem:[#allocation3] sm:$0xff]
    %v91 = vld [vmem:[#allocation3 + $0x8] sm:$0xff]
    %v92 = vld [vmem:[#allocation6] sm:$0xff]
    %v93 = vld [vmem:[#allocation6 + $0x8] sm:$0xff]
    %v94 = vld [vmem:[#allocation6 + $0x10] sm:$0xff]
    %v95 = vld [vmem:[#allocation6 + $0x18] sm:$0xff]
    %vm96 = vcmask 261120
    %v98 = vsel %vm96, %v90, 0
    %v101 = vsel %vm96, %v91, 0
    %103 = vmatpush.msra.mxu0 0.0
    %104 = vmatpush.msra.mxu0 0.0
    %105 = vmatpush.msra.mxu0 0.0
    %106 = vmatpush.msra.mxu0 0.0
    %107 = vmatpush.msra.mxu0 0.0
    %108 = vmatpush.msra.mxu0 0.0
    %109 = vmatpush.msra.mxu0 0.0
    %110 = vmatpush.msra.mxu0 0.0
    %111 = vmatpush.msra.mxu0 0.0
    %112 = vmatpush.msra.mxu0 0.0
    %113 = vmatpush.msra.mxu0 0.0
    %114 = vmatpush.msra.mxu0 0.0
    %115 = vmatpush.msra.mxu0 %v95
    %116 = vmatpush.msra.mxu0 %v94
    %117 = vmatpush.msra.mxu0 %v93
    %118 = vmatpush.msra.mxu0 %v92
    %119 = vmatmul.f32.gmra.mxu0 %v98
    %v120 = vpop.f32.mrf.mxu0
    %v121 = vadd.f32 0.0, %v120
    %122 = vmatmul.f32.gmra.mxu0 %v101
    %v123 = vpop.f32.mrf.mxu0
    %v124 = vadd.f32 0.0, %v123
    %125 = vdwg.mxu0
    %v126 = vadd.f32 %v88, %v121
    %v127 = vadd.f32 %v89, %v124
    %vm128 = vcmask 523264
    %129 = vst.msk [vmem:[#allocation2] sm:$0xff] %vm128, %v126
    %130 = vst.msk [vmem:[#allocation2 + $0x8] sm:$0xff] %vm128, %v127
    // Predicated region
    $region38: #{tpu_custom_call.1} parent=1 // pred_check
      %p131 = pneg %p81
    $region39: #{tpu_custom_call.1} parent=1 // pred_check_branch
      %133 = sbr.rel (%p131) target = $region41
    $region40: #{tpu_custom_call.1} parent=1 // pred_region
      %v134 = vld [vmem:[#allocation8] sm:$0xff]
      %v135 = vld [vmem:[#allocation8 + $0x8] sm:$0xff]
      %v136 = vld [vmem:[#allocation9] sm:$0xff]
      %v137 = vld [vmem:[#allocation9 + $0x8] sm:$0xff]
      %v138 = vld [vmem:[#allocation2] sm:$0xff]
      %v139 = vld [vmem:[#allocation2 + $0x8] sm:$0xff]
      %142 = vrot.lane.b32.xlu0 %v138, 120
      %v143 = vpop.permute.xlu0 %142
      %144 = vrot.lane.b32.xlu0 %v139, 120
      %v145 = vpop.permute.xlu0 %144
      %148 = vrot.lane.b32.xlu0 %v138, 8
      %v149 = vpop.permute.xlu0 %148
      %150 = vrot.lane.b32.xlu0 %v139, 8
      %v151 = vpop.permute.xlu0 %150
      %vm154 = vcmask 64512
      %v155 = vsel %vm154, %v143, %v149
      %v156 = vsel %vm154, %v145, %v151
      %v157 = vmul.f32 %v138, %v134
      %v158 = vmul.f32 %v139, %v135
      %v159 = vmul.f32 %v155, %v136
      %v160 = vmul.f32 %v156, %v137
      %v161 = vadd.f32 %v157, %v159
      %v162 = vadd.f32 %v158, %v160
      %vm163 = vcmask 130048
      %164 = vst.msk [vmem:[#allocation11] sm:$0xff] %vm163, %v161
      %165 = vst.msk [vmem:[#allocation11 + $0x8] sm:$0xff] %vm163, %v162
      %v166 = vld [vmem:[#allocation2] sm:$0xff]
      %v167 = vld [vmem:[#allocation2 + $0x8] sm:$0xff]
      %170 = vrot.lane.b32.xlu0 %v166, 104
      %v171 = vpop.permute.xlu0 %170
      %172 = vrot.lane.b32.xlu0 %v167, 104
      %v173 = vpop.permute.xlu0 %172
      %176 = vrot.lane.b32.xlu0 %v166, 120
      %v177 = vpop.permute.xlu0 %176
      %178 = vrot.lane.b32.xlu0 %v167, 120
      %v179 = vpop.permute.xlu0 %178
      %v182 = vsel %vm154, %v171, %v177
      %v183 = vsel %vm154, %v173, %v179
      %186 = vrot.lane.b32.xlu0 %v134, 16
      %v187 = vpop.permute.xlu0 %186
      %188 = vrot.lane.b32.xlu0 %v135, 16
      %v189 = vpop.permute.xlu0 %188
      %v192 = vmul.f32 %v166, %v187
      %v193 = vmul.f32 %v167, %v189
      %v194 = vmul.f32 %v182, %v136
      %v195 = vmul.f32 %v183, %v137
      %198 = vrot.lane.b32.xlu0 %v194, 16
      %v199 = vpop.permute.xlu0 %198
      %200 = vrot.lane.b32.xlu0 %v195, 16
      %v201 = vpop.permute.xlu0 %200
      %v204 = vadd.f32 %v192, %v199
      %v205 = vadd.f32 %v193, %v201
      %vm206 = vcmask 261248
      %207 = vst.msk [vmem:[#allocation11] sm:$0xff] %vm206, %v204
      %208 = vst.msk [vmem:[#allocation11 + $0x8] sm:$0xff] %vm206, %v205
      %v209 = vld [vmem:[#allocation2] sm:$0xff]
      %v210 = vld [vmem:[#allocation2 + $0x8] sm:$0xff]
      %213 = vrot.lane.b32.xlu0 %v209, 88
      %v214 = vpop.permute.xlu0 %213
      %215 = vrot.lane.b32.xlu0 %v210, 88
      %v216 = vpop.permute.xlu0 %215
      %219 = vrot.lane.b32.xlu0 %v209, 104
      %v220 = vpop.permute.xlu0 %219
      %221 = vrot.lane.b32.xlu0 %v210, 104
      %v222 = vpop.permute.xlu0 %221
      %v225 = vsel %vm154, %v214, %v220
      %v226 = vsel %vm154, %v216, %v222
      %227 = vrot.lane.b32.xlu0 %v134, 32
      %v228 = vpop.permute.xlu0 %227
      %229 = vrot.lane.b32.xlu0 %v135, 32
      %v230 = vpop.permute.xlu0 %229
      %v233 = vmul.f32 %v209, %v228
      %v234 = vmul.f32 %v210, %v230
      %v235 = vmul.f32 %v225, %v136
      %v236 = vmul.f32 %v226, %v137
      %239 = vrot.lane.b32.xlu0 %v235, 32
      %v240 = vpop.permute.xlu0 %239
      %241 = vrot.lane.b32.xlu0 %v236, 32
      %v242 = vpop.permute.xlu0 %241
      %v245 = vadd.f32 %v233, %v240
      %v246 = vadd.f32 %v234, %v242
      %vm247 = vcmask 392448
      %248 = vst.msk [vmem:[#allocation11] sm:$0xff] %vm247, %v245
      %249 = vst.msk [vmem:[#allocation11 + $0x8] sm:$0xff] %vm247, %v246
      %v250 = vld [vmem:[#allocation2] sm:$0xff]
      %v251 = vld [vmem:[#allocation2 + $0x8] sm:$0xff]
      %254 = vrot.lane.b32.xlu0 %v250, 72
      %v255 = vpop.permute.xlu0 %254
      %256 = vrot.lane.b32.xlu0 %v251, 72
      %v257 = vpop.permute.xlu0 %256
      %260 = vrot.lane.b32.xlu0 %v250, 88
      %v261 = vpop.permute.xlu0 %260
      %262 = vrot.lane.b32.xlu0 %v251, 88
      %v263 = vpop.permute.xlu0 %262
      %v266 = vsel %vm154, %v255, %v261
      %v267 = vsel %vm154, %v257, %v263
      %268 = vrot.lane.b32.xlu0 %v134, 48
      %v269 = vpop.permute.xlu0 %268
      %270 = vrot.lane.b32.xlu0 %v135, 48
      %v271 = vpop.permute.xlu0 %270
      %v274 = vmul.f32 %v250, %v269
      %v275 = vmul.f32 %v251, %v271
      %v276 = vmul.f32 %v266, %v136
      %v277 = vmul.f32 %v267, %v137
      %280 = vrot.lane.b32.xlu0 %v276, 48
      %v281 = vpop.permute.xlu0 %280
      %282 = vrot.lane.b32.xlu0 %v277, 48
      %v283 = vpop.permute.xlu0 %282
      %v286 = vadd.f32 %v274, %v281
      %v287 = vadd.f32 %v275, %v283
      %vm288 = vcmask 523648
      %289 = vst.msk [vmem:[#allocation11] sm:$0xff] %vm288, %v286
      %290 = vst.msk [vmem:[#allocation11 + $0x8] sm:$0xff] %vm288, %v287
    $region41: #{tpu_custom_call.1} parent=1 // pred_fallthru
      _
    // Predicated region
    $region42: #{tpu_custom_call.1} parent=1 // pred_check
      _
    $region43: #{tpu_custom_call.1} parent=1 // pred_check_branch
      %292 = sbr.rel (0) target = $region45
    $region44: #{tpu_custom_call.1} parent=1 // pred_region
      %294 = vsyncadd [#allocation5], 0
      %s295 = sshll.u32 [#allocation11], 4
      %s296 = int_to_ptr.vmem [resolvable:$true] %s295
      %s297 = sshll.u32 %s4, 4
      %s298 = int_to_ptr.hbm [resolvable:$true] %s297
      %303 = dma.vmem_to_hbm [thread:$0]  %s296, 256, %s298, [#allocation5], 128, 128, 8
    $region45: #{tpu_custom_call.1} parent=1 // pred_fallthru
      _
    // Predicated region
    $region46: #{tpu_custom_call.1} parent=1 // pred_check
      _
    $region47: #{tpu_custom_call.1} parent=1 // pred_check_branch
      %305 = sbr.rel (0) target = $region49
    $region48: #{tpu_custom_call.1} parent=1 // pred_region
      %307 = dma.done [#allocation5], 256
    $region49: #{tpu_custom_call.1} parent=1 // pred_fallthru
      _
    %308 = vsyncpa [#allocation4], 1
    %309 = vsyncpa [#allocation7], 1
    %310 = vsyncpa [#allocation10], 1
    %311 = vsyncpa [#allocation5], 1

</llo_original>
